<compile_context>
chip_gen: v7x
topology: tpu7x:2x2x1
jax: 0.10.0
libtpu: 0.0.40
codegen_flags: <defaults>
</compile_context>

<pallas_src>
import functools

import jax
import jax.numpy as jnp
from jax import lax
from jax.experimental import pallas as pl
from jax.experimental.pallas import tpu as pltpu


# ---------------------------------------------------------------------------
# In-kernel helpers
# ---------------------------------------------------------------------------
def _interp_weights(g, size):
    """1-D bilinear interpolation weights (align_corners=True, zeros padding).

    g: (B, T) normalized coords in grid_sample convention.
    Returns (B, T, size) f32 where w[b, t, j] is the weight of source index j
    for output position t.  Out-of-range taps get an all-zero one-hot row,
    which reproduces padding_mode='zeros'.
    """
    B, T = g.shape
    pos = (g + 1.0) * (0.5 * (size - 1))                      # (B, T)
    i0f = jnp.floor(pos)
    w1 = pos - i0f
    w0 = 1.0 - w1
    i0 = i0f.astype(jnp.int32)[:, :, None]                    # (B, T, 1)
    src = lax.broadcasted_iota(jnp.int32, (T, size), 1)[None]  # (1, T, size)
    oh0 = (src == i0).astype(jnp.float32)                     # zero row if OOB
    oh1 = (src == i0 + 1).astype(jnp.float32)
    return oh0 * w0[:, :, None] + oh1 * w1[:, :, None]        # (B, T, size)


def _random_transform_kernel(rand_ref, x_ref, o_ref, *, target_size, k_ratio,
                             delta, fliplr, flipud):
    B, C, H, W = x_ref.shape
    T = target_size
    f32 = jnp.float32

    # ---- fused weight construction (VPU; ~B*T*(H+W) cheap ops) -------------
    t_idx = lax.broadcasted_iota(jnp.int32, (1, T), 1).astype(f32)
    direct = t_idx * ((k_ratio + 1.0) / (T - 1)) - 1.0         # (1, T) linspace(-1, k)

    r = rand_ref[...]                                          # (B, 4)
    x_shift = (r[:, 0:1] - 0.5) * (2.0 * delta)                # (B, 1)
    y_shift = (r[:, 1:2] - 0.5) * (2.0 * delta)
    gx = direct + x_shift                                      # (B, T)
    gy = direct + y_shift
    if fliplr:
        gx = jnp.where(r[:, 2:3] > 0.5, -gx, gx)
    if flipud:
        gy = jnp.where(r[:, 3:4] > 0.5, -gy, gy)

    wx = _interp_weights(gx, W)                                # (B, T, W)
    wy = _interp_weights(gy, H)                                # (B, T, H)

    # ---- contraction 1 (over W): one matmul per batch element, M = C*H -----
    x = x_ref[...].reshape(B, C * H, W)
    t1 = lax.dot_general(x, wx, (((2,), (2,)), ((0,), (0,))),
                         preferred_element_type=f32)           # (B, C*H, T)

    # ---- contraction 2 (over H): batched over (B, C) ------------------------
    # Natural output order (y, x) falls out directly -> no transpose anywhere.
    t1 = t1.reshape(B * C, H, T)
    wy_bc = jnp.broadcast_to(wy[:, None], (B, C, T, H)).reshape(B * C, T, H)
    out = lax.dot_general(wy_bc, t1, (((2,), (1,)), ((0,), (0,))),
                          preferred_element_type=f32)          # (B*C, T, T)

    # Leading-dim split is layout-free; last dim T < 128 lanes -> masked store,
    # negligible at ~5 KiB per step.
    o_ref[...] = out.reshape(B, C, T, T).astype(o_ref.dtype)


# ---------------------------------------------------------------------------
# Wrapper
# ---------------------------------------------------------------------------
def random_transform_pallas(x, randgen, *, source_size, target_size, shift=8,
                            fliplr=True, flipud=False, block_b=None):
    N, C, H, W = x.shape
    assert H == source_size and W == source_size
    T = target_size

    if block_b is None:
        block_b = N if N <= 8 else 8
    assert N % block_b == 0, "pad the batch to a multiple of block_b"
    steps = N // block_b

    k_ratio = float(T) / float(source_size)
    delta = float(shift) / float(source_size - 1)   # torch.linspace(0,1,S)[shift]

    kernel = functools.partial(
        _random_transform_kernel, target_size=T, k_ratio=k_ratio, delta=delta,
        fliplr=fliplr, flipud=flipud)

    return pl.pallas_call(
        kernel,
        out_shape=jax.ShapeDtypeStruct((N, C, T, T), x.dtype),
        grid=(steps,),
        in_specs=[
            # randgen block lives in VMEM so the weight build vectorizes over B.
            pl.BlockSpec((block_b, 4), lambda g: (g, 0)),
            pl.BlockSpec((block_b, C, H, W), lambda g: (g, 0, 0, 0)),
        ],
        out_specs=pl.BlockSpec((block_b, C, T, T), lambda g: (g, 0, 0, 0)),
        compiler_params=pltpu.CompilerParams(
            dimension_semantics=("parallel",) if steps >= 4 else ("arbitrary",)),
    )(randgen, x)


class RandomTransformPallas:
    """JAX/Pallas port of the PyTorch RandomTransform module (forward pass).

    randgen must be passed explicitly (the PyTorch randgen=None branch that
    draws torch.rand internally is handled by the caller supplying uniforms).
    """

    def __init__(self, source_size, target_size, shift=8, fliplr=True,
                 flipud=False, mode='bilinear', align=True):
        assert mode == 'bilinear' and align, "kernel implements bilinear/align_corners=True"
        self.source_size = source_size
        self.target_size = target_size
        self.shift = shift
        self.fliplr = fliplr
        self.flipud = flipud
        k = float(target_size) / float(source_size)
        # Same formulas the kernel uses (kept for the pure-JAX reference path).
        self.direct = (jnp.arange(target_size, dtype=jnp.float32)
                       * ((k + 1.0) / (target_size - 1)) - 1.0)     # (T,)
        self.delta = float(shift) / float(source_size - 1)

    def shifted_coords(self, randgen):
        """Per-batch 1-D sample coordinates gx (N,T) and gy (N,T) — reference only."""
        x_shift = (randgen[:, 0] - 0.5) * 2.0 * self.delta
        y_shift = (randgen[:, 1] - 0.5) * 2.0 * self.delta
        gx = self.direct[None, :] + x_shift[:, None]
        gy = self.direct[None, :] + y_shift[:, None]
        if self.fliplr:
            gx = jnp.where(randgen[:, 2:3] > 0.5, -gx, gx)
        if self.flipud:
            gy = jnp.where(randgen[:, 3:4] > 0.5, -gy, gy)
        return gx, gy

    def __call__(self, x, randgen):
        return random_transform_pallas(
            x, randgen, source_size=self.source_size,
            target_size=self.target_size, shift=self.shift,
            fliplr=self.fliplr, flipud=self.flipud)


# ---------------------------------------------------------------------------
# Pure-JAX reference (gather-based grid_sample) for correctness checking.
# ---------------------------------------------------------------------------
def _grid_sample_ref(x, grid):
    N, C, H, W = x.shape
    gx, gy = grid[..., 0], grid[..., 1]
    ix = (gx + 1.0) * 0.5 * (W - 1)
    iy = (gy + 1.0) * 0.5 * (H - 1)
    ix0 = jnp.floor(ix).astype(jnp.int32); ix1 = ix0 + 1
    iy0 = jnp.floor(iy).astype(jnp.int32); iy1 = iy0 + 1
    wx1 = ix - ix0; wx0 = 1.0 - wx1
    wy1 = iy - iy0; wy0 = 1.0 - wy1

    bidx = jnp.arange(N)[:, None, None, None]
    cidx = jnp.arange(C)[None, :, None, None]

    def gather(iy_, ix_):
        valid = ((ix_ >= 0) & (ix_ <= W - 1) & (iy_ >= 0) & (iy_ <= H - 1))
        ixc = jnp.clip(ix_, 0, W - 1)
        iyc = jnp.clip(iy_, 0, H - 1)
        v = x[bidx, cidx, iyc[:, None, :, :], ixc[:, None, :, :]]
        return v * valid[:, None, :, :].astype(x.dtype)

    return (gather(iy0, ix0) * (wy0 * wx0)[:, None]
            + gather(iy0, ix1) * (wy0 * wx1)[:, None]
            + gather(iy1, ix0) * (wy1 * wx0)[:, None]
            + gather(iy1, ix1) * (wy1 * wx1)[:, None])


if __name__ == "__main__":
    N, C = 2, 4
    SOURCE, TARGET = 16, 12

    key = jax.random.PRNGKey(0)
    kx, kr = jax.random.split(key)
    x = jax.random.normal(kx, (N, C, SOURCE, SOURCE), dtype=jnp.float32)
    randgen = jax.random.uniform(kr, (N, 4), dtype=jnp.float32)

    mod = RandomTransformPallas(SOURCE, TARGET, shift=8, fliplr=True, flipud=False)
    out = jax.block_until_ready(mod(x, randgen))
    assert out.shape == (N, C, TARGET, TARGET)

    # Reference check against an explicit gather-based grid_sample.
    gx, gy = mod.shifted_coords(randgen)
    grid = jnp.stack(
        [jnp.broadcast_to(gx[:, None, :], (N, TARGET, TARGET)),
         jnp.broadcast_to(gy[:, :, None], (N, TARGET, TARGET))], axis=-1)
    ref = _grid_sample_ref(x, grid)
    assert jnp.allclose(out, ref, atol=1e-4, rtol=1e-4), "mismatch vs reference"

    print("KERNEL_OK")
</pallas_src>

<mosaic_0001>
module attributes {stable_mosaic.version = 11 : i64} {
  func.func @_random_transform_kernel(%arg0: i32, %arg1: memref<2x4xf32, #tpu.memory_space<vmem>>, %arg2: memref<2x4x16x16xf32, #tpu.memory_space<vmem>>, %arg3: memref<2x4x12x12xf32, #tpu.memory_space<vmem>>) attributes {dimension_semantics = [#tpu.dimension_semantics<arbitrary>], iteration_bounds = array<i64: 1>, scalar_prefetch = 0 : i64, scratch_operands = 0 : i64, tpu.core_type = #tpu.core_type<tc>, window_params = [{transform_indices = @transform_0, window_bounds = array<i64: 2, 4>}, {transform_indices = @transform_1, window_bounds = array<i64: 2, 4, 16, 16>}, {transform_indices = @transform_2, window_bounds = array<i64: 2, 4, 12, 12>}]} {
    %0 = tpu.iota {dimensions = array<i32: 1>} : vector<1x12xi32>
    %1 = arith.sitofp %0 : vector<1x12xi32> to vector<1x12xf32>
    %cst = arith.constant 0.159090906 : f32
    %2 = vector.broadcast %cst : f32 to vector<1x12xf32>
    %3 = arith.mulf %1, %2 : vector<1x12xf32>
    %cst_0 = arith.constant 1.000000e+00 : f32
    %4 = vector.broadcast %cst_0 : f32 to vector<1x12xf32>
    %5 = arith.subf %3, %4 : vector<1x12xf32>
    %c0 = arith.constant 0 : index
    %c0_1 = arith.constant 0 : index
    %6 = vector.load %arg1[%c0, %c0_1] : memref<2x4xf32, #tpu.memory_space<vmem>>, vector<2x4xf32>
    %7 = vector.extract_strided_slice %6 {offsets = [0, 0], sizes = [2, 1], strides = [1, 1]} : vector<2x4xf32> to vector<2x1xf32>
    %cst_2 = arith.constant 5.000000e-01 : f32
    %8 = vector.broadcast %cst_2 : f32 to vector<2x1xf32>
    %9 = arith.subf %7, %8 : vector<2x1xf32>
    %cst_3 = arith.constant 1.06666672 : f32
    %10 = vector.broadcast %cst_3 : f32 to vector<2x1xf32>
    %11 = arith.mulf %9, %10 : vector<2x1xf32>
    %12 = vector.extract_strided_slice %6 {offsets = [0, 1], sizes = [2, 1], strides = [1, 1]} : vector<2x4xf32> to vector<2x1xf32>
    %cst_4 = arith.constant 5.000000e-01 : f32
    %13 = vector.broadcast %cst_4 : f32 to vector<2x1xf32>
    %14 = arith.subf %12, %13 : vector<2x1xf32>
    %cst_5 = arith.constant 1.06666672 : f32
    %15 = vector.broadcast %cst_5 : f32 to vector<2x1xf32>
    %16 = arith.mulf %14, %15 : vector<2x1xf32>
    %17 = vector.broadcast %5 : vector<1x12xf32> to vector<2x12xf32>
    %18 = vector.broadcast %11 : vector<2x1xf32> to vector<2x12xf32>
    %19 = arith.addf %17, %18 : vector<2x12xf32>
    %20 = vector.broadcast %5 : vector<1x12xf32> to vector<2x12xf32>
    %21 = vector.broadcast %16 : vector<2x1xf32> to vector<2x12xf32>
    %22 = arith.addf %20, %21 : vector<2x12xf32>
    %23 = vector.extract_strided_slice %6 {offsets = [0, 2], sizes = [2, 1], strides = [1, 1]} : vector<2x4xf32> to vector<2x1xf32>
    %cst_6 = arith.constant 5.000000e-01 : f32
    %24 = vector.broadcast %cst_6 : f32 to vector<2x1xf32>
    %25 = arith.cmpf ogt, %23, %24 : vector<2x1xf32>
    %cst_7 = arith.constant 0.000000e+00 : f32
    %26 = vector.broadcast %cst_7 : f32 to vector<2x12xf32>
    %27 = arith.subf %26, %19 : vector<2x12xf32>
    %28 = vector.shape_cast %25 : vector<2x1xi1> to vector<2x1xi1>
    %29 = vector.broadcast %28 : vector<2x1xi1> to vector<2x12xi1>
    %30 = arith.select %29, %27, %19 : vector<2x12xi1>, vector<2x12xf32>
    %cst_8 = arith.constant 1.000000e+00 : f32
    %31 = vector.broadcast %cst_8 : f32 to vector<2x12xf32>
    %32 = arith.addf %30, %31 : vector<2x12xf32>
    %cst_9 = arith.constant 7.500000e+00 : f32
    %33 = vector.broadcast %cst_9 : f32 to vector<2x12xf32>
    %34 = arith.mulf %32, %33 : vector<2x12xf32>
    %35 = math.floor %34 : vector<2x12xf32>
    %36 = arith.subf %34, %35 : vector<2x12xf32>
    %cst_10 = arith.constant 1.000000e+00 : f32
    %37 = vector.broadcast %cst_10 : f32 to vector<2x12xf32>
    %38 = arith.subf %37, %36 : vector<2x12xf32>
    %39 = arith.fptosi %35 : vector<2x12xf32> to vector<2x12xi32>
    %40 = vector.shape_cast %39 : vector<2x12xi32> to vector<2x12x1xi32>
    %41 = tpu.iota {dimensions = array<i32: 1>} : vector<12x16xi32>
    %42 = vector.shape_cast %41 : vector<12x16xi32> to vector<1x12x16xi32>
    %43 = vector.broadcast %42 : vector<1x12x16xi32> to vector<2x12x16xi32>
    %44 = vector.broadcast %40 : vector<2x12x1xi32> to vector<2x12x16xi32>
    %45 = arith.cmpi eq, %43, %44 : vector<2x12x16xi32>
    %46 = arith.extui %45 : vector<2x12x16xi1> to vector<2x12x16xi32>
    %47 = arith.sitofp %46 : vector<2x12x16xi32> to vector<2x12x16xf32>
    %c1_i32 = arith.constant 1 : i32
    %48 = vector.broadcast %c1_i32 : i32 to vector<2x12x1xi32>
    %49 = arith.addi %40, %48 : vector<2x12x1xi32>
    %50 = vector.broadcast %42 : vector<1x12x16xi32> to vector<2x12x16xi32>
    %51 = vector.broadcast %49 : vector<2x12x1xi32> to vector<2x12x16xi32>
    %52 = arith.cmpi eq, %50, %51 : vector<2x12x16xi32>
    %53 = arith.extui %52 : vector<2x12x16xi1> to vector<2x12x16xi32>
    %54 = arith.sitofp %53 : vector<2x12x16xi32> to vector<2x12x16xf32>
    %55 = vector.shape_cast %38 : vector<2x12xf32> to vector<2x12x1xf32>
    %56 = vector.broadcast %55 : vector<2x12x1xf32> to vector<2x12x16xf32>
    %57 = arith.mulf %47, %56 : vector<2x12x16xf32>
    %58 = vector.shape_cast %36 : vector<2x12xf32> to vector<2x12x1xf32>
    %59 = vector.broadcast %58 : vector<2x12x1xf32> to vector<2x12x16xf32>
    %60 = arith.mulf %54, %59 : vector<2x12x16xf32>
    %61 = arith.addf %57, %60 : vector<2x12x16xf32>
    %cst_11 = arith.constant 1.000000e+00 : f32
    %62 = vector.broadcast %cst_11 : f32 to vector<2x12xf32>
    %63 = arith.addf %22, %62 : vector<2x12xf32>
    %cst_12 = arith.constant 7.500000e+00 : f32
    %64 = vector.broadcast %cst_12 : f32 to vector<2x12xf32>
    %65 = arith.mulf %63, %64 : vector<2x12xf32>
    %66 = math.floor %65 : vector<2x12xf32>
    %67 = arith.subf %65, %66 : vector<2x12xf32>
    %cst_13 = arith.constant 1.000000e+00 : f32
    %68 = vector.broadcast %cst_13 : f32 to vector<2x12xf32>
    %69 = arith.subf %68, %67 : vector<2x12xf32>
    %70 = arith.fptosi %66 : vector<2x12xf32> to vector<2x12xi32>
    %71 = vector.shape_cast %70 : vector<2x12xi32> to vector<2x12x1xi32>
    %72 = tpu.iota {dimensions = array<i32: 1>} : vector<12x16xi32>
    %73 = vector.shape_cast %72 : vector<12x16xi32> to vector<1x12x16xi32>
    %74 = vector.broadcast %73 : vector<1x12x16xi32> to vector<2x12x16xi32>
    %75 = vector.broadcast %71 : vector<2x12x1xi32> to vector<2x12x16xi32>
    %76 = arith.cmpi eq, %74, %75 : vector<2x12x16xi32>
    %77 = arith.extui %76 : vector<2x12x16xi1> to vector<2x12x16xi32>
    %78 = arith.sitofp %77 : vector<2x12x16xi32> to vector<2x12x16xf32>
    %c1_i32_14 = arith.constant 1 : i32
    %79 = vector.broadcast %c1_i32_14 : i32 to vector<2x12x1xi32>
    %80 = arith.addi %71, %79 : vector<2x12x1xi32>
    %81 = vector.broadcast %73 : vector<1x12x16xi32> to vector<2x12x16xi32>
    %82 = vector.broadcast %80 : vector<2x12x1xi32> to vector<2x12x16xi32>
    %83 = arith.cmpi eq, %81, %82 : vector<2x12x16xi32>
    %84 = arith.extui %83 : vector<2x12x16xi1> to vector<2x12x16xi32>
    %85 = arith.sitofp %84 : vector<2x12x16xi32> to vector<2x12x16xf32>
    %86 = vector.shape_cast %69 : vector<2x12xf32> to vector<2x12x1xf32>
    %87 = vector.broadcast %86 : vector<2x12x1xf32> to vector<2x12x16xf32>
    %88 = arith.mulf %78, %87 : vector<2x12x16xf32>
    %89 = vector.shape_cast %67 : vector<2x12xf32> to vector<2x12x1xf32>
    %90 = vector.broadcast %89 : vector<2x12x1xf32> to vector<2x12x16xf32>
    %91 = arith.mulf %85, %90 : vector<2x12x16xf32>
    %92 = arith.addf %88, %91 : vector<2x12x16xf32>
    %c0_15 = arith.constant 0 : index
    %c0_16 = arith.constant 0 : index
    %c0_17 = arith.constant 0 : index
    %c0_18 = arith.constant 0 : index
    %93 = vector.load %arg2[%c0_15, %c0_16, %c0_17, %c0_18] : memref<2x4x16x16xf32, #tpu.memory_space<vmem>>, vector<2x4x16x16xf32>
    %94 = vector.shape_cast %93 : vector<2x4x16x16xf32> to vector<2x64x16xf32>
    %cst_19 = arith.constant dense<0.000000e+00> : vector<2x64x12xf32>
    %95 = tpu.matmul %94, %61, %cst_19 {dimension_numbers = #tpu.dot_dimension_numbers<[2], [2], [1], [1], [0, 0, 0, 1, 1, 1], [0], [0]>} : vector<2x64x16xf32>, vector<2x12x16xf32>, vector<2x64x12xf32> -> vector<2x64x12xf32>
    %96 = vector.shape_cast %95 : vector<2x64x12xf32> to vector<8x16x12xf32>
    %97 = vector.shape_cast %92 : vector<2x12x16xf32> to vector<2x1x12x16xf32>
    %98 = vector.shape_cast %97 : vector<2x1x12x16xf32> to vector<2x1x12x16xf32>
    %99 = vector.broadcast %98 : vector<2x1x12x16xf32> to vector<2x4x12x16xf32>
    %100 = vector.shape_cast %99 : vector<2x4x12x16xf32> to vector<8x12x16xf32>
    %cst_20 = arith.constant dense<0.000000e+00> : vector<8x12x12xf32>
    %101 = tpu.matmul %100, %96, %cst_20 {dimension_numbers = #tpu.dot_dimension_numbers<[2], [1], [1], [2], [0, 0, 0, 1, 1, 2], [0], [0]>} : vector<8x12x16xf32>, vector<8x16x12xf32>, vector<8x12x12xf32> -> vector<8x12x12xf32>
    %102 = vector.shape_cast %101 : vector<8x12x12xf32> to vector<2x4x12x12xf32>
    %c0_21 = arith.constant 0 : index
    %c0_22 = arith.constant 0 : index
    %c0_23 = arith.constant 0 : index
    %c0_24 = arith.constant 0 : index
    %103 = vector.load %arg3[%c0_21, %c0_22, %c0_23, %c0_24] : memref<2x4x12x12xf32, #tpu.memory_space<vmem>>, vector<2x4x12x12xf32>
    tpu.vector_store %arg3[%c0_21, %c0_22, %c0_23, %c0_24], %102 {strides = array<i32>} : memref<2x4x12x12xf32, #tpu.memory_space<vmem>>, vector<2x4x12x12xf32>,
    return
  }
  func.func @transform_0(%arg0: i32) -> (i32, i32) {
    %c0_i32 = arith.constant 0 : i32
    %c0_i32_0 = arith.constant 0 : i32
    return %arg0, %c0_i32 : i32, i32
  }
  func.func @transform_1(%arg0: i32) -> (i32, i32, i32, i32) {
    %c0_i32 = arith.constant 0 : i32
    %c0_i32_0 = arith.constant 0 : i32
    %c0_i32_1 = arith.constant 0 : i32
    %c0_i32_2 = arith.constant 0 : i32
    return %arg0, %c0_i32, %c0_i32_0, %c0_i32_1 : i32, i32, i32, i32
  }
  func.func @transform_2(%arg0: i32) -> (i32, i32, i32, i32) {
    %c0_i32 = arith.constant 0 : i32
    %c0_i32_0 = arith.constant 0 : i32
    %c0_i32_1 = arith.constant 0 : i32
    %c0_i32_2 = arith.constant 0 : i32
    return %arg0, %c0_i32, %c0_i32_0, %c0_i32_1 : i32, i32, i32, i32
  }
}

</mosaic_0001>

<llo_original>
// kernel: tpu_custom_call.1
$region0: #{tpu_custom_call.1}
  #allocation0 [shape = 'u32[]', space=smem, size = 0x4, offset = 0x4, fixed_abs, tag = 'smem constant byte address 0x4 - core index']
  #allocation1 [shape = 'u32[144,128]{1,0:T(1,128)}', space=vmem, size = 0x12000, scoped, tag = 'internal scratch']
  %s0 = inlined_call_operand.hbm [shape: f32[2,4], index: 0, kind: input, shape index: {}]
  %s1 = inlined_call_operand.hbm [shape: f32[2,4,16,16], index: 1, kind: input, shape index: {}]
  %s2 = inlined_call_operand.vmem [shape: f32[2,4,12,12], index: 2, kind: output, shape index: {}]
  %s3 = sld [smem:[#allocation0]]
  $region26: #{tpu_custom_call.1} parent=0
    _
  %s5 = ssub.s32 1, %s3
  %s6 = scalar_select 0, %s5, %s3
  $region1: #{tpu_custom_call.1} parent=0
    #allocation2 [shape = 'u8[1024]{0}', space=vmem, size = 0x400, scoped, tag = 'input window, operand 0, single buffered']
    #allocation3 [shape = 's32[1]{0}', space=sflag, size = 0x4, scoped, tag = 'scoped memory for tpu_custom_call.1']
    #allocation4 [shape = 'u8[65536]{0}', space=vmem, size = 0x10000, scoped, tag = 'input window, operand 1, single buffered']
    #allocation5 [shape = 's32[1]{0}', space=sflag, size = 0x4, scoped, tag = 'scoped memory for tpu_custom_call.1']
    %7 = vsyncpa [#allocation3], 0
    %8 = vsyncpa [#allocation5], 0
    // Predicated region
    $region2: #{tpu_custom_call.1} parent=1 // pred_check
      _
    $region3: #{tpu_custom_call.1} parent=1 // pred_check_branch
      %10 = sbr.rel (0) target = $region5
    $region4: #{tpu_custom_call.1} parent=1 // pred_region
      %s12 = ssub.s32 32, 32
      %13 = vsyncadd [#allocation3], %s12
      %s15 = sshll.u32 [#allocation2], 4
      %s16 = int_to_ptr.vmem [resolvable:$true] %s15
      %18 = dma.hbm_to_vmem [thread:$0]  %s0, 32, %s16, [#allocation3]
    $region5: #{tpu_custom_call.1} parent=1 // pred_fallthru
      _
    // Predicated region
    $region6: #{tpu_custom_call.1} parent=1 // pred_check
      _
    $region7: #{tpu_custom_call.1} parent=1 // pred_check_branch
      %20 = sbr.rel (0) target = $region9
    $region8: #{tpu_custom_call.1} parent=1 // pred_region
      %s22 = ssub.s32 2048, 2048
      %23 = vsyncadd [#allocation5], %s22
      %s24 = sshll.u32 [#allocation4], 4
      %s25 = int_to_ptr.vmem [resolvable:$true] %s24
      %30 = dma.hbm_to_vmem [thread:$0]  %s1, 2048, %s25, [#allocation5], 128, 128, 8
    $region9: #{tpu_custom_call.1} parent=1 // pred_fallthru
      _
    // Predicated region
    $region10: #{tpu_custom_call.1} parent=1 // pred_check
      _
    $region11: #{tpu_custom_call.1} parent=1 // pred_check_branch
      %32 = sbr.rel (0) target = $region13
    $region12: #{tpu_custom_call.1} parent=1 // pred_region
      %33 = dma.done [#allocation3], 32
    $region13: #{tpu_custom_call.1} parent=1 // pred_fallthru
      _
    // Predicated region
    $region14: #{tpu_custom_call.1} parent=1 // pred_check
      _
    $region15: #{tpu_custom_call.1} parent=1 // pred_check_branch
      %35 = sbr.rel (0) target = $region17
    $region16: #{tpu_custom_call.1} parent=1 // pred_region
      %36 = dma.done [#allocation5], 2048
    $region17: #{tpu_custom_call.1} parent=1 // pred_fallthru
      _
    %v37 = vlaneseq
    %v38 = vand.u32 %v37, 127
    %v39 = vcvt.s32.f32 %v38
    %v40 = vmul.f32 %v39, 0.1590909
    %v41 = vsub.f32 %v40, 1.0
    %v42 = vld [vmem:[#allocation2] sm:$0x3]
    %v43 = vsub.f32 %v42, 0.5
    %v44 = vmul.f32 %v43, 1.0666667
    %46 = vset.pattern.permute.xlu0 0
    %47 = vperm.xlu0 %46, %v44
    %v48 = vpop.permute.xlu0 %47
    %v50 = vadd.f32 %v41, %v48
    %51 = vset.pattern.permute.xlu0 1
    %52 = vperm.xlu0 %51, %v44
    %v53 = vpop.permute.xlu0 %52
    %v55 = vadd.f32 %v41, %v53
    %vm56 = vcmp.gt.f32.partialorder %v42, 0.5
    %v57 = vsub.f32 0.0, %v50
    %v58 = vsel %vm56, 1, 0
    %59 = vset.pattern.permute.xlu0 2
    %60 = vperm.xlu0 %59, %v58
    %v61 = vpop.permute.xlu0 %60
    %vm62 = vcmp.eq.s32.totalorder %v61, 1
    %v63 = vsel %vm62, %v57, %v50
    %v64 = vadd.f32 %v63, 1.0
    %v65 = vmul.f32 %v64, 7.5
    %v66 = vfloor.f32 %v65
    %v67 = vsub.f32 %v65, %v66
    %v68 = vsub.f32 1.0, %v67
    %v69 = vcvt.f32.s32.to.zero.pseudo %v66
    %v70 = vlaneseq
    %v71 = vshrl.u32 %v70, 7
    %v72 = vsub.s32 0, %v71
    %v73 = vrot.slane %v69, %v72
    %75 = vbcast.lane.b32.xlu0 %v73, 256
    %v76 = vpop.permute.xlu0 %75
    %s78 = sor.u32 256, 8
    %79 = vbcast.lane.b32.xlu0 %v73, %s78
    %v80 = vpop.permute.xlu0 %79
    %v81 = vlaneseq
    %v82 = vshrl.u32 %v81, 7
    %v83 = vsub.s32 1, %v82
    %v84 = vrot.slane %v69, %v83
    %86 = vbcast.lane.b32.xlu0 %v84, 256
    %v87 = vpop.permute.xlu0 %86
    %s89 = sor.u32 256, 8
    %90 = vbcast.lane.b32.xlu0 %v84, %s89
    %v91 = vpop.permute.xlu0 %90
    %vm92 = vcmp.eq.s32.totalorder %v38, %v76
    %vm93 = vcmp.eq.s32.totalorder %v38, %v80
    %vm94 = vcmp.eq.s32.totalorder %v38, %v87
    %vm95 = vcmp.eq.s32.totalorder %v38, %v91
    %v96 = vsel %vm92, 1, 0
    %v97 = vsel %vm93, 1, 0
    %v98 = vsel %vm94, 1, 0
    %v99 = vsel %vm95, 1, 0
    %v100 = vcvt.s32.f32 %v96
    %v101 = vcvt.s32.f32 %v97
    %v102 = vcvt.s32.f32 %v98
    %v103 = vcvt.s32.f32 %v99
    %v104 = vadd.s32 %v76, 1
    %v105 = vadd.s32 %v80, 1
    %v106 = vadd.s32 %v87, 1
    %v107 = vadd.s32 %v91, 1
    %vm108 = vcmp.eq.s32.totalorder %v38, %v104
    %vm109 = vcmp.eq.s32.totalorder %v38, %v105
    %vm110 = vcmp.eq.s32.totalorder %v38, %v106
    %vm111 = vcmp.eq.s32.totalorder %v38, %v107
    %v112 = vsel %vm108, 1, 0
    %v113 = vsel %vm109, 1, 0
    %v114 = vsel %vm110, 1, 0
    %v115 = vsel %vm111, 1, 0
    %v116 = vcvt.s32.f32 %v112
    %v117 = vcvt.s32.f32 %v113
    %v118 = vcvt.s32.f32 %v114
    %v119 = vcvt.s32.f32 %v115
    %v120 = vlaneseq
    %v121 = vshrl.u32 %v120, 7
    %v122 = vsub.s32 0, %v121
    %v123 = vrot.slane %v68, %v122
    %125 = vbcast.lane.b32.xlu0 %v123, 256
    %v126 = vpop.permute.xlu0 %125
    %s128 = sor.u32 256, 8
    %129 = vbcast.lane.b32.xlu0 %v123, %s128
    %v130 = vpop.permute.xlu0 %129
    %v131 = vlaneseq
    %v132 = vshrl.u32 %v131, 7
    %v133 = vsub.s32 1, %v132
    %v134 = vrot.slane %v68, %v133
    %136 = vbcast.lane.b32.xlu0 %v134, 256
    %v137 = vpop.permute.xlu0 %136
    %s139 = sor.u32 256, 8
    %140 = vbcast.lane.b32.xlu0 %v134, %s139
    %v141 = vpop.permute.xlu0 %140
    %v142 = vmul.f32 %v100, %v126
    %v143 = vmul.f32 %v101, %v130
    %v144 = vmul.f32 %v102, %v137
    %v145 = vmul.f32 %v103, %v141
    %v146 = vlaneseq
    %v147 = vshrl.u32 %v146, 7
    %v148 = vsub.s32 0, %v147
    %v149 = vrot.slane %v67, %v148
    %151 = vbcast.lane.b32.xlu0 %v149, 256
    %v152 = vpop.permute.xlu0 %151
    %s154 = sor.u32 256, 8
    %155 = vbcast.lane.b32.xlu0 %v149, %s154
    %v156 = vpop.permute.xlu0 %155
    %v157 = vlaneseq
    %v158 = vshrl.u32 %v157, 7
    %v159 = vsub.s32 1, %v158
    %v160 = vrot.slane %v67, %v159
    %162 = vbcast.lane.b32.xlu0 %v160, 256
    %v163 = vpop.permute.xlu0 %162
    %s165 = sor.u32 256, 8
    %166 = vbcast.lane.b32.xlu0 %v160, %s165
    %v167 = vpop.permute.xlu0 %166
    %v168 = vmul.f32 %v116, %v152
    %v169 = vmul.f32 %v117, %v156
    %v170 = vmul.f32 %v118, %v163
    %v171 = vmul.f32 %v119, %v167
    %v172 = vadd.f32 %v142, %v168
    %v173 = vadd.f32 %v143, %v169
    %v174 = vadd.f32 %v144, %v170
    %v175 = vadd.f32 %v145, %v171
    %v176 = vadd.f32 %v55, 1.0
    %v177 = vmul.f32 %v176, 7.5
    %v178 = vfloor.f32 %v177
    %v179 = vsub.f32 %v177, %v178
    %v180 = vsub.f32 1.0, %v179
    %v181 = vcvt.f32.s32.to.zero.pseudo %v178
    %v182 = vlaneseq
    %v183 = vshrl.u32 %v182, 7
    %v184 = vsub.s32 0, %v183
    %v185 = vrot.slane %v181, %v184
    %187 = vbcast.lane.b32.xlu0 %v185, 256
    %v188 = vpop.permute.xlu0 %187
    %s190 = sor.u32 256, 8
    %191 = vbcast.lane.b32.xlu0 %v185, %s190
    %v192 = vpop.permute.xlu0 %191
    %v193 = vlaneseq
    %v194 = vshrl.u32 %v193, 7
    %v195 = vsub.s32 1, %v194
    %v196 = vrot.slane %v181, %v195
    %198 = vbcast.lane.b32.xlu0 %v196, 256
    %v199 = vpop.permute.xlu0 %198
    %s201 = sor.u32 256, 8
    %202 = vbcast.lane.b32.xlu0 %v196, %s201
    %v203 = vpop.permute.xlu0 %202
    %vm204 = vcmp.eq.s32.totalorder %v38, %v188
    %vm205 = vcmp.eq.s32.totalorder %v38, %v192
    %vm206 = vcmp.eq.s32.totalorder %v38, %v199
    %vm207 = vcmp.eq.s32.totalorder %v38, %v203
    %v208 = vsel %vm204, 1, 0
    %v209 = vsel %vm205, 1, 0
    %v210 = vsel %vm206, 1, 0
    %v211 = vsel %vm207, 1, 0
    %v212 = vcvt.s32.f32 %v208
    %v213 = vcvt.s32.f32 %v209
    %v214 = vcvt.s32.f32 %v210
    %v215 = vcvt.s32.f32 %v211
    %v216 = vadd.s32 %v188, 1
    %v217 = vadd.s32 %v192, 1
    %v218 = vadd.s32 %v199, 1
    %v219 = vadd.s32 %v203, 1
    %vm220 = vcmp.eq.s32.totalorder %v38, %v216
    %vm221 = vcmp.eq.s32.totalorder %v38, %v217
    %vm222 = vcmp.eq.s32.totalorder %v38, %v218
    %vm223 = vcmp.eq.s32.totalorder %v38, %v219
    %v224 = vsel %vm220, 1, 0
    %v225 = vsel %vm221, 1, 0
    %v226 = vsel %vm222, 1, 0
    %v227 = vsel %vm223, 1, 0
    %v228 = vcvt.s32.f32 %v224
    %v229 = vcvt.s32.f32 %v225
    %v230 = vcvt.s32.f32 %v226
    %v231 = vcvt.s32.f32 %v227
    %v232 = vlaneseq
    %v233 = vshrl.u32 %v232, 7
    %v234 = vsub.s32 0, %v233
    %v235 = vrot.slane %v180, %v234
    %237 = vbcast.lane.b32.xlu0 %v235, 256
    %v238 = vpop.permute.xlu0 %237
    %s240 = sor.u32 256, 8
    %241 = vbcast.lane.b32.xlu0 %v235, %s240
    %v242 = vpop.permute.xlu0 %241
    %v243 = vlaneseq
    %v244 = vshrl.u32 %v243, 7
    %v245 = vsub.s32 1, %v244
    %v246 = vrot.slane %v180, %v245
    %248 = vbcast.lane.b32.xlu0 %v246, 256
    %v249 = vpop.permute.xlu0 %248
    %s251 = sor.u32 256, 8
    %252 = vbcast.lane.b32.xlu0 %v246, %s251
    %v253 = vpop.permute.xlu0 %252
    %v254 = vmul.f32 %v212, %v238
    %v255 = vmul.f32 %v213, %v242
    %v256 = vmul.f32 %v214, %v249
    %v257 = vmul.f32 %v215, %v253
    %v258 = vlaneseq
    %v259 = vshrl.u32 %v258, 7
    %v260 = vsub.s32 0, %v259
    %v261 = vrot.slane %v179, %v260
    %263 = vbcast.lane.b32.xlu0 %v261, 256
    %v264 = vpop.permute.xlu0 %263
    %s266 = sor.u32 256, 8
    %267 = vbcast.lane.b32.xlu0 %v261, %s266
    %v268 = vpop.permute.xlu0 %267
    %v269 = vlaneseq
    %v270 = vshrl.u32 %v269, 7
    %v271 = vsub.s32 1, %v270
    %v272 = vrot.slane %v179, %v271
    %274 = vbcast.lane.b32.xlu0 %v272, 256
    %v275 = vpop.permute.xlu0 %274
    %s277 = sor.u32 256, 8
    %278 = vbcast.lane.b32.xlu0 %v272, %s277
    %v279 = vpop.permute.xlu0 %278
    %v280 = vmul.f32 %v228, %v264
    %v281 = vmul.f32 %v229, %v268
    %v282 = vmul.f32 %v230, %v275
    %v283 = vmul.f32 %v231, %v279
    %v284 = vadd.f32 %v254, %v280
    %v285 = vadd.f32 %v255, %v281
    %v286 = vadd.f32 %v256, %v282
    %v287 = vadd.f32 %v257, %v283
    %v288 = vld [vmem:[#allocation4] sm:$0xff]
    %v289 = vld [vmem:[#allocation4 + $0x8] sm:$0xff]
    %v290 = vld [vmem:[#allocation4 + $0x10] sm:$0xff]
    %v291 = vld [vmem:[#allocation4 + $0x18] sm:$0xff]
    %v292 = vld [vmem:[#allocation4 + $0x20] sm:$0xff]
    %v293 = vld [vmem:[#allocation4 + $0x28] sm:$0xff]
    %v294 = vld [vmem:[#allocation4 + $0x30] sm:$0xff]
    %v295 = vld [vmem:[#allocation4 + $0x38] sm:$0xff]
    %v296 = vld [vmem:[#allocation4 + $0x40] sm:$0xff]
    %v297 = vld [vmem:[#allocation4 + $0x48] sm:$0xff]
    %v298 = vld [vmem:[#allocation4 + $0x50] sm:$0xff]
    %v299 = vld [vmem:[#allocation4 + $0x58] sm:$0xff]
    %v300 = vld [vmem:[#allocation4 + $0x60] sm:$0xff]
    %v301 = vld [vmem:[#allocation4 + $0x68] sm:$0xff]
    %v302 = vld [vmem:[#allocation4 + $0x70] sm:$0xff]
    %v303 = vld [vmem:[#allocation4 + $0x78] sm:$0xff]
    %vm304 = vcmask 130048
    %v306 = vsel %vm304, %v288, 0
    %v309 = vsel %vm304, %v289, 0
    %v312 = vsel %vm304, %v290, 0
    %v315 = vsel %vm304, %v291, 0
    %v318 = vsel %vm304, %v292, 0
    %v321 = vsel %vm304, %v293, 0
    %v324 = vsel %vm304, %v294, 0
    %v327 = vsel %vm304, %v295, 0
    %v330 = vsel %vm304, %v172, 0
    %v333 = vsel %vm304, %v173, 0
    %335 = vmatprep.subr.mxu0 0.0
    %336 = vmatpush1.xpose.msra.mxu0 %v330
    %337 = vmatprep.subr.mxu0 0.0
    %338 = vmatpush1.xpose.msra.mxu0 %v333
    %339 = vmatprep.subr.mxu0 0.0
    %340 = vmatpush1.xpose.msra.mxu0 0.0
    %341 = vmatprep.subr.mxu0 0.0
    %342 = vmatpush1.xpose.msra.mxu0 0.0
    %343 = vmatprep.subr.mxu0 0.0
    %344 = vmatpush1.xpose.msra.mxu0 0.0
    %345 = vmatprep.subr.mxu0 0.0
    %346 = vmatpush1.xpose.msra.mxu0 0.0
    %347 = vmatprep.subr.mxu0 0.0
    %348 = vmatpush1.xpose.msra.mxu0 0.0
    %349 = vmatprep.subr.mxu0 0.0
    %350 = vmatpush1.xpose.msra.mxu0 0.0
    %351 = vmatprep.subr.mxu0 0.0
    %352 = vmatpush1.xpose.msra.mxu0 0.0
    %353 = vmatprep.subr.mxu0 0.0
    %354 = vmatpush1.xpose.msra.mxu0 0.0
    %355 = vmatprep.subr.mxu0 0.0
    %356 = vmatpush1.xpose.msra.mxu0 0.0
    %357 = vmatprep.subr.mxu0 0.0
    %358 = vmatpush1.xpose.msra.mxu0 0.0
    %359 = vmatprep.subr.mxu0 0.0
    %360 = vmatpush1.xpose.msra.mxu0 0.0
    %361 = vmatprep.subr.mxu0 0.0
    %362 = vmatpush1.xpose.msra.mxu0 0.0
    %363 = vmatprep.subr.mxu0 0.0
    %364 = vmatpush1.xpose.msra.mxu0 0.0
    %365 = vmatprep.subr.mxu0 0.0
    %366 = vmatpush1.xpose.msra.mxu0 0.0
    %367 = vmatprep.subr.mxu0 0.0
    %368 = vmatpush1.xpose.msra.mxu0 0.0
    %369 = vmatprep.subr.mxu0 0.0
    %370 = vmatpush1.xpose.msra.mxu0 0.0
    %371 = vmatprep.subr.mxu0 0.0
    %372 = vmatpush1.xpose.msra.mxu0 0.0
    %373 = vmatprep.subr.mxu0 0.0
    %374 = vmatpush1.xpose.msra.mxu0 0.0
    %375 = vmatprep.subr.mxu0 0.0
    %376 = vmatpush1.xpose.msra.mxu0 0.0
    %377 = vmatprep.subr.mxu0 0.0
    %378 = vmatpush1.xpose.msra.mxu0 0.0
    %379 = vmatprep.subr.mxu0 0.0
    %380 = vmatpush1.xpose.msra.mxu0 0.0
    %381 = vmatprep.subr.mxu0 0.0
    %382 = vmatpush1.xpose.msra.mxu0 0.0
    %383 = vmatprep.subr.mxu0 0.0
    %384 = vmatpush1.xpose.msra.mxu0 0.0
    %385 = vmatprep.subr.mxu0 0.0
    %386 = vmatpush1.xpose.msra.mxu0 0.0
    %387 = vmatprep.subr.mxu0 0.0
    %388 = vmatpush1.xpose.msra.mxu0 0.0
    %389 = vmatprep.subr.mxu0 0.0
    %390 = vmatpush1.xpose.msra.mxu0 0.0
    %391 = vmatprep.subr.mxu0 0.0
    %392 = vmatpush1.xpose.msra.mxu0 0.0
    %393 = vmatprep.subr.mxu0 0.0
    %394 = vmatpush1.xpose.msra.mxu0 0.0
    %395 = vmatprep.subr.mxu0 0.0
    %396 = vmatpush1.xpose.msra.mxu0 0.0
    %397 = vmatprep.subr.mxu0 0.0
    %398 = vmatpush1.xpose.msra.mxu0 0.0
    %399 = vmatprep.mubr.f32.mxu0 0.0
    %400 = vmatmul.mubr.f32.gmra.mrb[0].mxu0 %v306
    %v401 = vpop.f32.mrb[0].mxu0
    %v402 = vadd.f32 0.0, %v401
    %v403 = vpop.f32.mrb[0].mxu0
    %404 = vmatprep.mubr.f32.mxu0 0.0
    %405 = vmatmul.mubr.f32.gmra.mrb[0].mxu0 %v309
    %v406 = vpop.f32.mrb[0].mxu0
    %v407 = vadd.f32 0.0, %v406
    %v408 = vpop.f32.mrb[0].mxu0
    %409 = vmatprep.mubr.f32.mxu0 0.0
    %410 = vmatmul.mubr.f32.gmra.mrb[0].mxu0 %v312
    %v411 = vpop.f32.mrb[0].mxu0
    %v412 = vadd.f32 0.0, %v411
    %v413 = vpop.f32.mrb[0].mxu0
    %414 = vmatprep.mubr.f32.mxu0 0.0
    %415 = vmatmul.mubr.f32.gmra.mrb[0].mxu0 %v315
    %v416 = vpop.f32.mrb[0].mxu0
    %v417 = vadd.f32 0.0, %v416
    %v418 = vpop.f32.mrb[0].mxu0
    %419 = vmatprep.mubr.f32.mxu0 0.0
    %420 = vmatmul.mubr.f32.gmra.mrb[0].mxu0 %v318
    %v421 = vpop.f32.mrb[0].mxu0
    %v422 = vadd.f32 0.0, %v421
    %v423 = vpop.f32.mrb[0].mxu0
    %424 = vmatprep.mubr.f32.mxu0 0.0
    %425 = vmatmul.mubr.f32.gmra.mrb[0].mxu0 %v321
    %v426 = vpop.f32.mrb[0].mxu0
    %v427 = vadd.f32 0.0, %v426
    %v428 = vpop.f32.mrb[0].mxu0
    %429 = vmatprep.mubr.f32.mxu0 0.0
    %430 = vmatmul.mubr.f32.gmra.mrb[0].mxu0 %v324
    %v431 = vpop.f32.mrb[0].mxu0
    %v432 = vadd.f32 0.0, %v431
    %v433 = vpop.f32.mrb[0].mxu0
    %434 = vmatprep.mubr.f32.mxu0 0.0
    %435 = vmatmul.mubr.f32.gmra.mrb[0].mxu0 %v327
    %v436 = vpop.f32.mrb[0].mxu0
    %v437 = vadd.f32 0.0, %v436
    %v438 = vpop.f32.mrb[0].mxu0
    %439 = vdwg.mxu0
    %v441 = vsel %vm304, %v296, 0
    %v444 = vsel %vm304, %v297, 0
    %v447 = vsel %vm304, %v298, 0
    %v450 = vsel %vm304, %v299, 0
    %v453 = vsel %vm304, %v300, 0
    %v456 = vsel %vm304, %v301, 0
    %v459 = vsel %vm304, %v302, 0
    %v462 = vsel %vm304, %v303, 0
    %v465 = vsel %vm304, %v174, 0
    %v468 = vsel %vm304, %v175, 0
    %470 = vmatprep.subr.mxu0 0.0
    %471 = vmatpush1.xpose.msra.mxu0 %v465
    %472 = vmatprep.subr.mxu0 0.0
    %473 = vmatpush1.xpose.msra.mxu0 %v468
    %474 = vmatprep.subr.mxu0 0.0
    %475 = vmatpush1.xpose.msra.mxu0 0.0
    %476 = vmatprep.subr.mxu0 0.0
    %477 = vmatpush1.xpose.msra.mxu0 0.0
    %478 = vmatprep.subr.mxu0 0.0
    %479 = vmatpush1.xpose.msra.mxu0 0.0
    %480 = vmatprep.subr.mxu0 0.0
    %481 = vmatpush1.xpose.msra.mxu0 0.0
    %482 = vmatprep.subr.mxu0 0.0
    %483 = vmatpush1.xpose.msra.mxu0 0.0
    %484 = vmatprep.subr.mxu0 0.0
    %485 = vmatpush1.xpose.msra.mxu0 0.0
    %486 = vmatprep.subr.mxu0 0.0
    %487 = vmatpush1.xpose.msra.mxu0 0.0
    %488 = vmatprep.subr.mxu0 0.0
    %489 = vmatpush1.xpose.msra.mxu0 0.0
    %490 = vmatprep.subr.mxu0 0.0
    %491 = vmatpush1.xpose.msra.mxu0 0.0
    %492 = vmatprep.subr.mxu0 0.0
    %493 = vmatpush1.xpose.msra.mxu0 0.0
    %494 = vmatprep.subr.mxu0 0.0
    %495 = vmatpush1.xpose.msra.mxu0 0.0
    %496 = vmatprep.subr.mxu0 0.0
    %497 = vmatpush1.xpose.msra.mxu0 0.0
    %498 = vmatprep.subr.mxu0 0.0
    %499 = vmatpush1.xpose.msra.mxu0 0.0
    %500 = vmatprep.subr.mxu0 0.0
    %501 = vmatpush1.xpose.msra.mxu0 0.0
    %502 = vmatprep.subr.mxu0 0.0
    %503 = vmatpush1.xpose.msra.mxu0 0.0
    %504 = vmatprep.subr.mxu0 0.0
    %505 = vmatpush1.xpose.msra.mxu0 0.0
    %506 = vmatprep.subr.mxu0 0.0
    %507 = vmatpush1.xpose.msra.mxu0 0.0
    %508 = vmatprep.subr.mxu0 0.0
    %509 = vmatpush1.xpose.msra.mxu0 0.0
    %510 = vmatprep.subr.mxu0 0.0
    %511 = vmatpush1.xpose.msra.mxu0 0.0
    %512 = vmatprep.subr.mxu0 0.0
    %513 = vmatpush1.xpose.msra.mxu0 0.0
    %514 = vmatprep.subr.mxu0 0.0
    %515 = vmatpush1.xpose.msra.mxu0 0.0
    %516 = vmatprep.subr.mxu0 0.0
    %517 = vmatpush1.xpose.msra.mxu0 0.0
    %518 = vmatprep.subr.mxu0 0.0
    %519 = vmatpush1.xpose.msra.mxu0 0.0
    %520 = vmatprep.subr.mxu0 0.0
    %521 = vmatpush1.xpose.msra.mxu0 0.0
    %522 = vmatprep.subr.mxu0 0.0
    %523 = vmatpush1.xpose.msra.mxu0 0.0
    %524 = vmatprep.subr.mxu0 0.0
    %525 = vmatpush1.xpose.msra.mxu0 0.0
    %526 = vmatprep.subr.mxu0 0.0
    %527 = vmatpush1.xpose.msra.mxu0 0.0
    %528 = vmatprep.subr.mxu0 0.0
    %529 = vmatpush1.xpose.msra.mxu0 0.0
    %530 = vmatprep.subr.mxu0 0.0
    %531 = vmatpush1.xpose.msra.mxu0 0.0
    %532 = vmatprep.subr.mxu0 0.0
    %533 = vmatpush1.xpose.msra.mxu0 0.0
    %534 = vmatprep.mubr.f32.mxu0 0.0
    %535 = vmatmul.mubr.f32.gmra.mrb[0].mxu0 %v441
    %v536 = vpop.f32.mrb[0].mxu0
    %v537 = vadd.f32 0.0, %v536
    %v538 = vpop.f32.mrb[0].mxu0
    %539 = vmatprep.mubr.f32.mxu0 0.0
    %540 = vmatmul.mubr.f32.gmra.mrb[0].mxu0 %v444
    %v541 = vpop.f32.mrb[0].mxu0
    %v542 = vadd.f32 0.0, %v541
    %v543 = vpop.f32.mrb[0].mxu0
    %544 = vmatprep.mubr.f32.mxu0 0.0
    %545 = vmatmul.mubr.f32.gmra.mrb[0].mxu0 %v447
    %v546 = vpop.f32.mrb[0].mxu0
    %v547 = vadd.f32 0.0, %v546
    %v548 = vpop.f32.mrb[0].mxu0
    %549 = vmatprep.mubr.f32.mxu0 0.0
    %550 = vmatmul.mubr.f32.gmra.mrb[0].mxu0 %v450
    %v551 = vpop.f32.mrb[0].mxu0
    %v552 = vadd.f32 0.0, %v551
    %v553 = vpop.f32.mrb[0].mxu0
    %554 = vmatprep.mubr.f32.mxu0 0.0
    %555 = vmatmul.mubr.f32.gmra.mrb[0].mxu0 %v453
    %v556 = vpop.f32.mrb[0].mxu0
    %v557 = vadd.f32 0.0, %v556
    %v558 = vpop.f32.mrb[0].mxu0
    %559 = vmatprep.mubr.f32.mxu0 0.0
    %560 = vmatmul.mubr.f32.gmra.mrb[0].mxu0 %v456
    %v561 = vpop.f32.mrb[0].mxu0
    %v562 = vadd.f32 0.0, %v561
    %v563 = vpop.f32.mrb[0].mxu0
    %564 = vmatprep.mubr.f32.mxu0 0.0
    %565 = vmatmul.mubr.f32.gmra.mrb[0].mxu0 %v459
    %v566 = vpop.f32.mrb[0].mxu0
    %v567 = vadd.f32 0.0, %v566
    %v568 = vpop.f32.mrb[0].mxu0
    %569 = vmatprep.mubr.f32.mxu0 0.0
    %570 = vmatmul.mubr.f32.gmra.mrb[0].mxu0 %v462
    %v571 = vpop.f32.mrb[0].mxu0
    %v572 = vadd.f32 0.0, %v571
    %v573 = vpop.f32.mrb[0].mxu0
    %574 = vdwg.mxu0
    %v576 = vsel %vm304, %v284, 0
    %v579 = vsel %vm304, %v285, 0
    %581 = vmatprep.subr.mxu0 0.0
    %582 = vmatpush1.msra.mxu0 %v402
    %583 = vmatprep.subr.mxu0 0.0
    %584 = vmatpush1.msra.mxu0 %v407
    %585 = vmatprep.subr.mxu0 0.0
    %586 = vmatpush1.msra.mxu0 0.0
    %587 = vmatprep.subr.mxu0 0.0
    %588 = vmatpush1.msra.mxu0 0.0
    %589 = vmatprep.subr.mxu0 0.0
    %590 = vmatpush1.msra.mxu0 0.0
    %591 = vmatprep.subr.mxu0 0.0
    %592 = vmatpush1.msra.mxu0 0.0
    %593 = vmatprep.subr.mxu0 0.0
    %594 = vmatpush1.msra.mxu0 0.0
    %595 = vmatprep.subr.mxu0 0.0
    %596 = vmatpush1.msra.mxu0 0.0
    %597 = vmatprep.subr.mxu0 0.0
    %598 = vmatpush1.msra.mxu0 0.0
    %599 = vmatprep.subr.mxu0 0.0
    %600 = vmatpush1.msra.mxu0 0.0
    %601 = vmatprep.subr.mxu0 0.0
    %602 = vmatpush1.msra.mxu0 0.0
    %603 = vmatprep.subr.mxu0 0.0
    %604 = vmatpush1.msra.mxu0 0.0
    %605 = vmatprep.subr.mxu0 0.0
    %606 = vmatpush1.msra.mxu0 0.0
    %607 = vmatprep.subr.mxu0 0.0
    %608 = vmatpush1.msra.mxu0 0.0
    %609 = vmatprep.subr.mxu0 0.0
    %610 = vmatpush1.msra.mxu0 0.0
    %611 = vmatprep.subr.mxu0 0.0
    %612 = vmatpush1.msra.mxu0 0.0
    %613 = vmatprep.subr.mxu0 0.0
    %614 = vmatpush1.msra.mxu0 0.0
    %615 = vmatprep.subr.mxu0 0.0
    %616 = vmatpush1.msra.mxu0 0.0
    %617 = vmatprep.subr.mxu0 0.0
    %618 = vmatpush1.msra.mxu0 0.0
    %619 = vmatprep.subr.mxu0 0.0
    %620 = vmatpush1.msra.mxu0 0.0
    %621 = vmatprep.subr.mxu0 0.0
    %622 = vmatpush1.msra.mxu0 0.0
    %623 = vmatprep.subr.mxu0 0.0
    %624 = vmatpush1.msra.mxu0 0.0
    %625 = vmatprep.subr.mxu0 0.0
    %626 = vmatpush1.msra.mxu0 0.0
    %627 = vmatprep.subr.mxu0 0.0
    %628 = vmatpush1.msra.mxu0 0.0
    %629 = vmatprep.subr.mxu0 0.0
    %630 = vmatpush1.msra.mxu0 0.0
    %631 = vmatprep.subr.mxu0 0.0
    %632 = vmatpush1.msra.mxu0 0.0
    %633 = vmatprep.subr.mxu0 0.0
    %634 = vmatpush1.msra.mxu0 0.0
    %635 = vmatprep.subr.mxu0 0.0
    %636 = vmatpush1.msra.mxu0 0.0
    %637 = vmatprep.subr.mxu0 0.0
    %638 = vmatpush1.msra.mxu0 0.0
    %639 = vmatprep.subr.mxu0 0.0
    %640 = vmatpush1.msra.mxu0 0.0
    %641 = vmatprep.subr.mxu0 0.0
    %642 = vmatpush1.msra.mxu0 0.0
    %643 = vmatprep.subr.mxu0 0.0
    %644 = vmatpush1.msra.mxu0 0.0
    %645 = vmatprep.mubr.f32.mxu0 0.0
    %646 = vmatmul.mubr.f32.gmra.mrb[0].mxu0 %v576
    %v647 = vpop.f32.mrb[0].mxu0
    %v648 = vadd.f32 0.0, %v647
    %v649 = vpop.f32.mrb[0].mxu0
    %650 = vmatprep.mubr.f32.mxu0 0.0
    %651 = vmatmul.mubr.f32.gmra.mrb[0].mxu0 %v579
    %v652 = vpop.f32.mrb[0].mxu0
    %v653 = vadd.f32 0.0, %v652
    %v654 = vpop.f32.mrb[0].mxu0
    %655 = vdwg.mxu0
    %656 = vmatprep.subr.mxu0 0.0
    %657 = vmatpush1.msra.mxu0 %v412
    %658 = vmatprep.subr.mxu0 0.0
    %659 = vmatpush1.msra.mxu0 %v417
    %660 = vmatprep.subr.mxu0 0.0
    %661 = vmatpush1.msra.mxu0 0.0
    %662 = vmatprep.subr.mxu0 0.0
    %663 = vmatpush1.msra.mxu0 0.0
    %664 = vmatprep.subr.mxu0 0.0
    %665 = vmatpush1.msra.mxu0 0.0
    %666 = vmatprep.subr.mxu0 0.0
    %667 = vmatpush1.msra.mxu0 0.0
    %668 = vmatprep.subr.mxu0 0.0
    %669 = vmatpush1.msra.mxu0 0.0
    %670 = vmatprep.subr.mxu0 0.0
    %671 = vmatpush1.msra.mxu0 0.0
    %672 = vmatprep.subr.mxu0 0.0
    %673 = vmatpush1.msra.mxu0 0.0
    %674 = vmatprep.subr.mxu0 0.0
    %675 = vmatpush1.msra.mxu0 0.0
    %676 = vmatprep.subr.mxu0 0.0
    %677 = vmatpush1.msra.mxu0 0.0
    %678 = vmatprep.subr.mxu0 0.0
    %679 = vmatpush1.msra.mxu0 0.0
    %680 = vmatprep.subr.mxu0 0.0
    %681 = vmatpush1.msra.mxu0 0.0
    %682 = vmatprep.subr.mxu0 0.0
    %683 = vmatpush1.msra.mxu0 0.0
    %684 = vmatprep.subr.mxu0 0.0
    %685 = vmatpush1.msra.mxu0 0.0
    %686 = vmatprep.subr.mxu0 0.0
    %687 = vmatpush1.msra.mxu0 0.0
    %688 = vmatprep.subr.mxu0 0.0
    %689 = vmatpush1.msra.mxu0 0.0
    %690 = vmatprep.subr.mxu0 0.0
    %691 = vmatpush1.msra.mxu0 0.0
    %692 = vmatprep.subr.mxu0 0.0
    %693 = vmatpush1.msra.mxu0 0.0
    %694 = vmatprep.subr.mxu0 0.0
    %695 = vmatpush1.msra.mxu0 0.0
    %696 = vmatprep.subr.mxu0 0.0
    %697 = vmatpush1.msra.mxu0 0.0
    %698 = vmatprep.subr.mxu0 0.0
    %699 = vmatpush1.msra.mxu0 0.0
    %700 = vmatprep.subr.mxu0 0.0
    %701 = vmatpush1.msra.mxu0 0.0
    %702 = vmatprep.subr.mxu0 0.0
    %703 = vmatpush1.msra.mxu0 0.0
    %704 = vmatprep.subr.mxu0 0.0
    %705 = vmatpush1.msra.mxu0 0.0
    %706 = vmatprep.subr.mxu0 0.0
    %707 = vmatpush1.msra.mxu0 0.0
    %708 = vmatprep.subr.mxu0 0.0
    %709 = vmatpush1.msra.mxu0 0.0
    %710 = vmatprep.subr.mxu0 0.0
    %711 = vmatpush1.msra.mxu0 0.0
    %712 = vmatprep.subr.mxu0 0.0
    %713 = vmatpush1.msra.mxu0 0.0
    %714 = vmatprep.subr.mxu0 0.0
    %715 = vmatpush1.msra.mxu0 0.0
    %716 = vmatprep.subr.mxu0 0.0
    %717 = vmatpush1.msra.mxu0 0.0
    %718 = vmatprep.subr.mxu0 0.0
    %719 = vmatpush1.msra.mxu0 0.0
    %720 = vmatprep.mubr.f32.mxu0 0.0
    %721 = vmatmul.mubr.f32.gmra.mrb[0].mxu0 %v576
    %v722 = vpop.f32.mrb[0].mxu0
    %v723 = vadd.f32 0.0, %v722
    %v724 = vpop.f32.mrb[0].mxu0
    %725 = vmatprep.mubr.f32.mxu0 0.0
    %726 = vmatmul.mubr.f32.gmra.mrb[0].mxu0 %v579
    %v727 = vpop.f32.mrb[0].mxu0
    %v728 = vadd.f32 0.0, %v727
    %v729 = vpop.f32.mrb[0].mxu0
    %730 = vdwg.mxu0
    %731 = vmatprep.subr.mxu0 0.0
    %732 = vmatpush1.msra.mxu0 %v422
    %733 = vmatprep.subr.mxu0 0.0
    %734 = vmatpush1.msra.mxu0 %v427
    %735 = vmatprep.subr.mxu0 0.0
    %736 = vmatpush1.msra.mxu0 0.0
    %737 = vmatprep.subr.mxu0 0.0
    %738 = vmatpush1.msra.mxu0 0.0
    %739 = vmatprep.subr.mxu0 0.0
    %740 = vmatpush1.msra.mxu0 0.0
    %741 = vmatprep.subr.mxu0 0.0
    %742 = vmatpush1.msra.mxu0 0.0
    %743 = vmatprep.subr.mxu0 0.0
    %744 = vmatpush1.msra.mxu0 0.0
    %745 = vmatprep.subr.mxu0 0.0
    %746 = vmatpush1.msra.mxu0 0.0
    %747 = vmatprep.subr.mxu0 0.0
    %748 = vmatpush1.msra.mxu0 0.0
    %749 = vmatprep.subr.mxu0 0.0
    %750 = vmatpush1.msra.mxu0 0.0
    %751 = vmatprep.subr.mxu0 0.0
    %752 = vmatpush1.msra.mxu0 0.0
    %753 = vmatprep.subr.mxu0 0.0
    %754 = vmatpush1.msra.mxu0 0.0
    %755 = vmatprep.subr.mxu0 0.0
    %756 = vmatpush1.msra.mxu0 0.0
    %757 = vmatprep.subr.mxu0 0.0
    %758 = vmatpush1.msra.mxu0 0.0
    %759 = vmatprep.subr.mxu0 0.0
    %760 = vmatpush1.msra.mxu0 0.0
    %761 = vmatprep.subr.mxu0 0.0
    %762 = vmatpush1.msra.mxu0 0.0
    %763 = vmatprep.subr.mxu0 0.0
    %764 = vmatpush1.msra.mxu0 0.0
    %765 = vmatprep.subr.mxu0 0.0
    %766 = vmatpush1.msra.mxu0 0.0
    %767 = vmatprep.subr.mxu0 0.0
    %768 = vmatpush1.msra.mxu0 0.0
    %769 = vmatprep.subr.mxu0 0.0
    %770 = vmatpush1.msra.mxu0 0.0
    %771 = vmatprep.subr.mxu0 0.0
    %772 = vmatpush1.msra.mxu0 0.0
    %773 = vmatprep.subr.mxu0 0.0
    %774 = vmatpush1.msra.mxu0 0.0
    %775 = vmatprep.subr.mxu0 0.0
    %776 = vmatpush1.msra.mxu0 0.0
    %777 = vmatprep.subr.mxu0 0.0
    %778 = vmatpush1.msra.mxu0 0.0
    %779 = vmatprep.subr.mxu0 0.0
    %780 = vmatpush1.msra.mxu0 0.0
    %781 = vmatprep.subr.mxu0 0.0
    %782 = vmatpush1.msra.mxu0 0.0
    %783 = vmatprep.subr.mxu0 0.0
    %784 = vmatpush1.msra.mxu0 0.0
    %785 = vmatprep.subr.mxu0 0.0
    %786 = vmatpush1.msra.mxu0 0.0
    %787 = vmatprep.subr.mxu0 0.0
    %788 = vmatpush1.msra.mxu0 0.0
    %789 = vmatprep.subr.mxu0 0.0
    %790 = vmatpush1.msra.mxu0 0.0
    %791 = vmatprep.subr.mxu0 0.0
    %792 = vmatpush1.msra.mxu0 0.0
    %793 = vmatprep.subr.mxu0 0.0
    %794 = vmatpush1.msra.mxu0 0.0
    %795 = vmatprep.mubr.f32.mxu0 0.0
    %796 = vmatmul.mubr.f32.gmra.mrb[0].mxu0 %v576
    %v797 = vpop.f32.mrb[0].mxu0
    %v798 = vadd.f32 0.0, %v797
    %v799 = vpop.f32.mrb[0].mxu0
    %800 = vmatprep.mubr.f32.mxu0 0.0
    %801 = vmatmul.mubr.f32.gmra.mrb[0].mxu0 %v579
    %v802 = vpop.f32.mrb[0].mxu0
    %v803 = vadd.f32 0.0, %v802
    %v804 = vpop.f32.mrb[0].mxu0
    %805 = vdwg.mxu0
    %806 = vmatprep.subr.mxu0 0.0
    %807 = vmatpush1.msra.mxu0 %v432
    %808 = vmatprep.subr.mxu0 0.0
    %809 = vmatpush1.msra.mxu0 %v437
    %810 = vmatprep.subr.mxu0 0.0
    %811 = vmatpush1.msra.mxu0 0.0
    %812 = vmatprep.subr.mxu0 0.0
    %813 = vmatpush1.msra.mxu0 0.0
    %814 = vmatprep.subr.mxu0 0.0
    %815 = vmatpush1.msra.mxu0 0.0
    %816 = vmatprep.subr.mxu0 0.0
    %817 = vmatpush1.msra.mxu0 0.0
    %818 = vmatprep.subr.mxu0 0.0
    %819 = vmatpush1.msra.mxu0 0.0
    %820 = vmatprep.subr.mxu0 0.0
    %821 = vmatpush1.msra.mxu0 0.0
    %822 = vmatprep.subr.mxu0 0.0
    %823 = vmatpush1.msra.mxu0 0.0
    %824 = vmatprep.subr.mxu0 0.0
    %825 = vmatpush1.msra.mxu0 0.0
    %826 = vmatprep.subr.mxu0 0.0
    %827 = vmatpush1.msra.mxu0 0.0
    %828 = vmatprep.subr.mxu0 0.0
    %829 = vmatpush1.msra.mxu0 0.0
    %830 = vmatprep.subr.mxu0 0.0
    %831 = vmatpush1.msra.mxu0 0.0
    %832 = vmatprep.subr.mxu0 0.0
    %833 = vmatpush1.msra.mxu0 0.0
    %834 = vmatprep.subr.mxu0 0.0
    %835 = vmatpush1.msra.mxu0 0.0
    %836 = vmatprep.subr.mxu0 0.0
    %837 = vmatpush1.msra.mxu0 0.0
    %838 = vmatprep.subr.mxu0 0.0
    %839 = vmatpush1.msra.mxu0 0.0
    %840 = vmatprep.subr.mxu0 0.0
    %841 = vmatpush1.msra.mxu0 0.0
    %842 = vmatprep.subr.mxu0 0.0
    %843 = vmatpush1.msra.mxu0 0.0
    %844 = vmatprep.subr.mxu0 0.0
    %845 = vmatpush1.msra.mxu0 0.0
    %846 = vmatprep.subr.mxu0 0.0
    %847 = vmatpush1.msra.mxu0 0.0
    %848 = vmatprep.subr.mxu0 0.0
    %849 = vmatpush1.msra.mxu0 0.0
    %850 = vmatprep.subr.mxu0 0.0
    %851 = vmatpush1.msra.mxu0 0.0
    %852 = vmatprep.subr.mxu0 0.0
    %853 = vmatpush1.msra.mxu0 0.0
    %854 = vmatprep.subr.mxu0 0.0
    %855 = vmatpush1.msra.mxu0 0.0
    %856 = vmatprep.subr.mxu0 0.0
    %857 = vmatpush1.msra.mxu0 0.0
    %858 = vmatprep.subr.mxu0 0.0
    %859 = vmatpush1.msra.mxu0 0.0
    %860 = vmatprep.subr.mxu0 0.0
    %861 = vmatpush1.msra.mxu0 0.0
    %862 = vmatprep.subr.mxu0 0.0
    %863 = vmatpush1.msra.mxu0 0.0
    %864 = vmatprep.subr.mxu0 0.0
    %865 = vmatpush1.msra.mxu0 0.0
    %866 = vmatprep.subr.mxu0 0.0
    %867 = vmatpush1.msra.mxu0 0.0
    %868 = vmatprep.subr.mxu0 0.0
    %869 = vmatpush1.msra.mxu0 0.0
    %870 = vmatprep.mubr.f32.mxu0 0.0
    %871 = vmatmul.mubr.f32.gmra.mrb[0].mxu0 %v576
    %v872 = vpop.f32.mrb[0].mxu0
    %v873 = vadd.f32 0.0, %v872
    %v874 = vpop.f32.mrb[0].mxu0
    %875 = vmatprep.mubr.f32.mxu0 0.0
    %876 = vmatmul.mubr.f32.gmra.mrb[0].mxu0 %v579
    %v877 = vpop.f32.mrb[0].mxu0
    %v878 = vadd.f32 0.0, %v877
    %v879 = vpop.f32.mrb[0].mxu0
    %880 = vdwg.mxu0
    %v882 = vsel %vm304, %v286, 0
    %v885 = vsel %vm304, %v287, 0
    %887 = vmatprep.subr.mxu0 0.0
    %888 = vmatpush1.msra.mxu0 %v537
    %889 = vmatprep.subr.mxu0 0.0
    %890 = vmatpush1.msra.mxu0 %v542
    %891 = vmatprep.subr.mxu0 0.0
    %892 = vmatpush1.msra.mxu0 0.0
    %893 = vmatprep.subr.mxu0 0.0
    %894 = vmatpush1.msra.mxu0 0.0
    %895 = vmatprep.subr.mxu0 0.0
    %896 = vmatpush1.msra.mxu0 0.0
    %897 = vmatprep.subr.mxu0 0.0
    %898 = vmatpush1.msra.mxu0 0.0
    %899 = vmatprep.subr.mxu0 0.0
    %900 = vmatpush1.msra.mxu0 0.0
    %901 = vmatprep.subr.mxu0 0.0
    %902 = vmatpush1.msra.mxu0 0.0
    %903 = vmatprep.subr.mxu0 0.0
    %904 = vmatpush1.msra.mxu0 0.0
    %905 = vmatprep.subr.mxu0 0.0
    %906 = vmatpush1.msra.mxu0 0.0
    %907 = vmatprep.subr.mxu0 0.0
    %908 = vmatpush1.msra.mxu0 0.0
    %909 = vmatprep.subr.mxu0 0.0
    %910 = vmatpush1.msra.mxu0 0.0
    %911 = vmatprep.subr.mxu0 0.0
    %912 = vmatpush1.msra.mxu0 0.0
    %913 = vmatprep.subr.mxu0 0.0
    %914 = vmatpush1.msra.mxu0 0.0
    %915 = vmatprep.subr.mxu0 0.0
    %916 = vmatpush1.msra.mxu0 0.0
    %917 = vmatprep.subr.mxu0 0.0
    %918 = vmatpush1.msra.mxu0 0.0
    %919 = vmatprep.subr.mxu0 0.0
    %920 = vmatpush1.msra.mxu0 0.0
    %921 = vmatprep.subr.mxu0 0.0
    %922 = vmatpush1.msra.mxu0 0.0
    %923 = vmatprep.subr.mxu0 0.0
    %924 = vmatpush1.msra.mxu0 0.0
    %925 = vmatprep.subr.mxu0 0.0
    %926 = vmatpush1.msra.mxu0 0.0
    %927 = vmatprep.subr.mxu0 0.0
    %928 = vmatpush1.msra.mxu0 0.0
    %929 = vmatprep.subr.mxu0 0.0
    %930 = vmatpush1.msra.mxu0 0.0
    %931 = vmatprep.subr.mxu0 0.0
    %932 = vmatpush1.msra.mxu0 0.0
    %933 = vmatprep.subr.mxu0 0.0
    %934 = vmatpush1.msra.mxu0 0.0
    %935 = vmatprep.subr.mxu0 0.0
    %936 = vmatpush1.msra.mxu0 0.0
    %937 = vmatprep.subr.mxu0 0.0
    %938 = vmatpush1.msra.mxu0 0.0
    %939 = vmatprep.subr.mxu0 0.0
    %940 = vmatpush1.msra.mxu0 0.0
    %941 = vmatprep.subr.mxu0 0.0
    %942 = vmatpush1.msra.mxu0 0.0
    %943 = vmatprep.subr.mxu0 0.0
    %944 = vmatpush1.msra.mxu0 0.0
    %945 = vmatprep.subr.mxu0 0.0
    %946 = vmatpush1.msra.mxu0 0.0
    %947 = vmatprep.subr.mxu0 0.0
    %948 = vmatpush1.msra.mxu0 0.0
    %949 = vmatprep.subr.mxu0 0.0
    %950 = vmatpush1.msra.mxu0 0.0
    %951 = vmatprep.mubr.f32.mxu0 0.0
    %952 = vmatmul.mubr.f32.gmra.mrb[0].mxu0 %v882
    %v953 = vpop.f32.mrb[0].mxu0
    %v954 = vadd.f32 0.0, %v953
    %v955 = vpop.f32.mrb[0].mxu0
    %956 = vmatprep.mubr.f32.mxu0 0.0
    %957 = vmatmul.mubr.f32.gmra.mrb[0].mxu0 %v885
    %v958 = vpop.f32.mrb[0].mxu0
    %v959 = vadd.f32 0.0, %v958
    %v960 = vpop.f32.mrb[0].mxu0
    %961 = vdwg.mxu0
    %962 = vmatprep.subr.mxu0 0.0
    %963 = vmatpush1.msra.mxu0 %v547
    %964 = vmatprep.subr.mxu0 0.0
    %965 = vmatpush1.msra.mxu0 %v552
    %966 = vmatprep.subr.mxu0 0.0
    %967 = vmatpush1.msra.mxu0 0.0
    %968 = vmatprep.subr.mxu0 0.0
    %969 = vmatpush1.msra.mxu0 0.0
    %970 = vmatprep.subr.mxu0 0.0
    %971 = vmatpush1.msra.mxu0 0.0
    %972 = vmatprep.subr.mxu0 0.0
    %973 = vmatpush1.msra.mxu0 0.0
    %974 = vmatprep.subr.mxu0 0.0
    %975 = vmatpush1.msra.mxu0 0.0
    %976 = vmatprep.subr.mxu0 0.0
    %977 = vmatpush1.msra.mxu0 0.0
    %978 = vmatprep.subr.mxu0 0.0
    %979 = vmatpush1.msra.mxu0 0.0
    %980 = vmatprep.subr.mxu0 0.0
    %981 = vmatpush1.msra.mxu0 0.0
    %982 = vmatprep.subr.mxu0 0.0
    %983 = vmatpush1.msra.mxu0 0.0
    %984 = vmatprep.subr.mxu0 0.0
    %985 = vmatpush1.msra.mxu0 0.0
    %986 = vmatprep.subr.mxu0 0.0
    %987 = vmatpush1.msra.mxu0 0.0
    %988 = vmatprep.subr.mxu0 0.0
    %989 = vmatpush1.msra.mxu0 0.0
    %990 = vmatprep.subr.mxu0 0.0
    %991 = vmatpush1.msra.mxu0 0.0
    %992 = vmatprep.subr.mxu0 0.0
    %993 = vmatpush1.msra.mxu0 0.0
    %994 = vmatprep.subr.mxu0 0.0
    %995 = vmatpush1.msra.mxu0 0.0
    %996 = vmatprep.subr.mxu0 0.0
    %997 = vmatpush1.msra.mxu0 0.0
    %998 = vmatprep.subr.mxu0 0.0
    %999 = vmatpush1.msra.mxu0 0.0
    %1000 = vmatprep.subr.mxu0 0.0
    %1001 = vmatpush1.msra.mxu0 0.0
    %1002 = vmatprep.subr.mxu0 0.0
    %1003 = vmatpush1.msra.mxu0 0.0
    %1004 = vmatprep.subr.mxu0 0.0
    %1005 = vmatpush1.msra.mxu0 0.0
    %1006 = vmatprep.subr.mxu0 0.0
    %1007 = vmatpush1.msra.mxu0 0.0
    %1008 = vmatprep.subr.mxu0 0.0
    %1009 = vmatpush1.msra.mxu0 0.0
    %1010 = vmatprep.subr.mxu0 0.0
    %1011 = vmatpush1.msra.mxu0 0.0
    %1012 = vmatprep.subr.mxu0 0.0
    %1013 = vmatpush1.msra.mxu0 0.0
    %1014 = vmatprep.subr.mxu0 0.0
    %1015 = vmatpush1.msra.mxu0 0.0
    %1016 = vmatprep.subr.mxu0 0.0
    %1017 = vmatpush1.msra.mxu0 0.0
    %1018 = vmatprep.subr.mxu0 0.0
    %1019 = vmatpush1.msra.mxu0 0.0
    %1020 = vmatprep.subr.mxu0 0.0
    %1021 = vmatpush1.msra.mxu0 0.0
    %1022 = vmatprep.subr.mxu0 0.0
    %1023 = vmatpush1.msra.mxu0 0.0
    %1024 = vmatprep.subr.mxu0 0.0
    %1025 = vmatpush1.msra.mxu0 0.0
    %1026 = vmatprep.mubr.f32.mxu0 0.0
    %1027 = vmatmul.mubr.f32.gmra.mrb[0].mxu0 %v882
    %v1028 = vpop.f32.mrb[0].mxu0
    %v1029 = vadd.f32 0.0, %v1028
    %v1030 = vpop.f32.mrb[0].mxu0
    %1031 = vmatprep.mubr.f32.mxu0 0.0
    %1032 = vmatmul.mubr.f32.gmra.mrb[0].mxu0 %v885
    %v1033 = vpop.f32.mrb[0].mxu0
    %v1034 = vadd.f32 0.0, %v1033
    %v1035 = vpop.f32.mrb[0].mxu0
    %1036 = vdwg.mxu0
    %1037 = vmatprep.subr.mxu0 0.0
    %1038 = vmatpush1.msra.mxu0 %v557
    %1039 = vmatprep.subr.mxu0 0.0
    %1040 = vmatpush1.msra.mxu0 %v562
    %1041 = vmatprep.subr.mxu0 0.0
    %1042 = vmatpush1.msra.mxu0 0.0
    %1043 = vmatprep.subr.mxu0 0.0
    %1044 = vmatpush1.msra.mxu0 0.0
    %1045 = vmatprep.subr.mxu0 0.0
    %1046 = vmatpush1.msra.mxu0 0.0
    %1047 = vmatprep.subr.mxu0 0.0
    %1048 = vmatpush1.msra.mxu0 0.0
    %1049 = vmatprep.subr.mxu0 0.0
    %1050 = vmatpush1.msra.mxu0 0.0
    %1051 = vmatprep.subr.mxu0 0.0
    %1052 = vmatpush1.msra.mxu0 0.0
    %1053 = vmatprep.subr.mxu0 0.0
    %1054 = vmatpush1.msra.mxu0 0.0
    %1055 = vmatprep.subr.mxu0 0.0
    %1056 = vmatpush1.msra.mxu0 0.0
    %1057 = vmatprep.subr.mxu0 0.0
    %1058 = vmatpush1.msra.mxu0 0.0
    %1059 = vmatprep.subr.mxu0 0.0
    %1060 = vmatpush1.msra.mxu0 0.0
    %1061 = vmatprep.subr.mxu0 0.0
    %1062 = vmatpush1.msra.mxu0 0.0
    %1063 = vmatprep.subr.mxu0 0.0
    %1064 = vmatpush1.msra.mxu0 0.0
    %1065 = vmatprep.subr.mxu0 0.0
    %1066 = vmatpush1.msra.mxu0 0.0
    %1067 = vmatprep.subr.mxu0 0.0
    %1068 = vmatpush1.msra.mxu0 0.0
    %1069 = vmatprep.subr.mxu0 0.0
    %1070 = vmatpush1.msra.mxu0 0.0
    %1071 = vmatprep.subr.mxu0 0.0
    %1072 = vmatpush1.msra.mxu0 0.0
    %1073 = vmatprep.subr.mxu0 0.0
    %1074 = vmatpush1.msra.mxu0 0.0
    %1075 = vmatprep.subr.mxu0 0.0
    %1076 = vmatpush1.msra.mxu0 0.0
    %1077 = vmatprep.subr.mxu0 0.0
    %1078 = vmatpush1.msra.mxu0 0.0
    %1079 = vmatprep.subr.mxu0 0.0
    %1080 = vmatpush1.msra.mxu0 0.0
    %1081 = vmatprep.subr.mxu0 0.0
    %1082 = vmatpush1.msra.mxu0 0.0
    %1083 = vmatprep.subr.mxu0 0.0
    %1084 = vmatpush1.msra.mxu0 0.0
    %1085 = vmatprep.subr.mxu0 0.0
    %1086 = vmatpush1.msra.mxu0 0.0
    %1087 = vmatprep.subr.mxu0 0.0
    %1088 = vmatpush1.msra.mxu0 0.0
    %1089 = vmatprep.subr.mxu0 0.0
    %1090 = vmatpush1.msra.mxu0 0.0
    %1091 = vmatprep.subr.mxu0 0.0
    %1092 = vmatpush1.msra.mxu0 0.0
    %1093 = vmatprep.subr.mxu0 0.0
    %1094 = vmatpush1.msra.mxu0 0.0
    %1095 = vmatprep.subr.mxu0 0.0
    %1096 = vmatpush1.msra.mxu0 0.0
    %1097 = vmatprep.subr.mxu0 0.0
    %1098 = vmatpush1.msra.mxu0 0.0
    %1099 = vmatprep.subr.mxu0 0.0
    %1100 = vmatpush1.msra.mxu0 0.0
    %1101 = vmatprep.mubr.f32.mxu0 0.0
    %1102 = vmatmul.mubr.f32.gmra.mrb[0].mxu0 %v882
    %v1103 = vpop.f32.mrb[0].mxu0
    %v1104 = vadd.f32 0.0, %v1103
    %v1105 = vpop.f32.mrb[0].mxu0
    %1106 = vmatprep.mubr.f32.mxu0 0.0
    %1107 = vmatmul.mubr.f32.gmra.mrb[0].mxu0 %v885
    %v1108 = vpop.f32.mrb[0].mxu0
    %v1109 = vadd.f32 0.0, %v1108
    %v1110 = vpop.f32.mrb[0].mxu0
    %1111 = vdwg.mxu0
    %1112 = vmatprep.subr.mxu0 0.0
    %1113 = vmatpush1.msra.mxu0 %v567
    %1114 = vmatprep.subr.mxu0 0.0
    %1115 = vmatpush1.msra.mxu0 %v572
    %1116 = vmatprep.subr.mxu0 0.0
    %1117 = vmatpush1.msra.mxu0 0.0
    %1118 = vmatprep.subr.mxu0 0.0
    %1119 = vmatpush1.msra.mxu0 0.0
    %1120 = vmatprep.subr.mxu0 0.0
    %1121 = vmatpush1.msra.mxu0 0.0
    %1122 = vmatprep.subr.mxu0 0.0
    %1123 = vmatpush1.msra.mxu0 0.0
    %1124 = vmatprep.subr.mxu0 0.0
    %1125 = vmatpush1.msra.mxu0 0.0
    %1126 = vmatprep.subr.mxu0 0.0
    %1127 = vmatpush1.msra.mxu0 0.0
    %1128 = vmatprep.subr.mxu0 0.0
    %1129 = vmatpush1.msra.mxu0 0.0
    %1130 = vmatprep.subr.mxu0 0.0
    %1131 = vmatpush1.msra.mxu0 0.0
    %1132 = vmatprep.subr.mxu0 0.0
    %1133 = vmatpush1.msra.mxu0 0.0
    %1134 = vmatprep.subr.mxu0 0.0
    %1135 = vmatpush1.msra.mxu0 0.0
    %1136 = vmatprep.subr.mxu0 0.0
    %1137 = vmatpush1.msra.mxu0 0.0
    %1138 = vmatprep.subr.mxu0 0.0
    %1139 = vmatpush1.msra.mxu0 0.0
    %1140 = vmatprep.subr.mxu0 0.0
    %1141 = vmatpush1.msra.mxu0 0.0
    %1142 = vmatprep.subr.mxu0 0.0
    %1143 = vmatpush1.msra.mxu0 0.0
    %1144 = vmatprep.subr.mxu0 0.0
    %1145 = vmatpush1.msra.mxu0 0.0
    %1146 = vmatprep.subr.mxu0 0.0
    %1147 = vmatpush1.msra.mxu0 0.0
    %1148 = vmatprep.subr.mxu0 0.0
    %1149 = vmatpush1.msra.mxu0 0.0
    %1150 = vmatprep.subr.mxu0 0.0
    %1151 = vmatpush1.msra.mxu0 0.0
    %1152 = vmatprep.subr.mxu0 0.0
    %1153 = vmatpush1.msra.mxu0 0.0
    %1154 = vmatprep.subr.mxu0 0.0
    %1155 = vmatpush1.msra.mxu0 0.0
    %1156 = vmatprep.subr.mxu0 0.0
    %1157 = vmatpush1.msra.mxu0 0.0
    %1158 = vmatprep.subr.mxu0 0.0
    %1159 = vmatpush1.msra.mxu0 0.0
    %1160 = vmatprep.subr.mxu0 0.0
    %1161 = vmatpush1.msra.mxu0 0.0
    %1162 = vmatprep.subr.mxu0 0.0
    %1163 = vmatpush1.msra.mxu0 0.0
    %1164 = vmatprep.subr.mxu0 0.0
    %1165 = vmatpush1.msra.mxu0 0.0
    %1166 = vmatprep.subr.mxu0 0.0
    %1167 = vmatpush1.msra.mxu0 0.0
    %1168 = vmatprep.subr.mxu0 0.0
    %1169 = vmatpush1.msra.mxu0 0.0
    %1170 = vmatprep.subr.mxu0 0.0
    %1171 = vmatpush1.msra.mxu0 0.0
    %1172 = vmatprep.subr.mxu0 0.0
    %1173 = vmatpush1.msra.mxu0 0.0
    %1174 = vmatprep.subr.mxu0 0.0
    %1175 = vmatpush1.msra.mxu0 0.0
    %1176 = vmatprep.mubr.f32.mxu0 0.0
    %1177 = vmatmul.mubr.f32.gmra.mrb[0].mxu0 %v882
    %v1178 = vpop.f32.mrb[0].mxu0
    %v1179 = vadd.f32 0.0, %v1178
    %v1180 = vpop.f32.mrb[0].mxu0
    %1181 = vmatprep.mubr.f32.mxu0 0.0
    %1182 = vmatmul.mubr.f32.gmra.mrb[0].mxu0 %v885
    %v1183 = vpop.f32.mrb[0].mxu0
    %v1184 = vadd.f32 0.0, %v1183
    %v1185 = vpop.f32.mrb[0].mxu0
    %1186 = vdwg.mxu0
    %vm1187 = vcmask 97280
    %1188 = vst.msk [vmem:[%s2] sm:$0xff] %vm1187, %v648
    %vm1189 = vcmask 93184
    %1190 = vst.msk [vmem:[%s2 + $0x8] sm:$0xf] %vm1189, %v653
    %1191 = vst.msk [vmem:[%s2 + $0x10] sm:$0xff] %vm1187, %v723
    %1192 = vst.msk [vmem:[%s2 + $0x18] sm:$0xf] %vm1189, %v728
    %1193 = vst.msk [vmem:[%s2 + $0x20] sm:$0xff] %vm1187, %v798
    %1194 = vst.msk [vmem:[%s2 + $0x28] sm:$0xf] %vm1189, %v803
    %1195 = vst.msk [vmem:[%s2 + $0x30] sm:$0xff] %vm1187, %v873
    %1196 = vst.msk [vmem:[%s2 + $0x38] sm:$0xf] %vm1189, %v878
    %1197 = vst.msk [vmem:[%s2 + $0x40] sm:$0xff] %vm1187, %v954
    %1198 = vst.msk [vmem:[%s2 + $0x48] sm:$0xf] %vm1189, %v959
    %1199 = vst.msk [vmem:[%s2 + $0x50] sm:$0xff] %vm1187, %v1029
    %1200 = vst.msk [vmem:[%s2 + $0x58] sm:$0xf] %vm1189, %v1034
    %1201 = vst.msk [vmem:[%s2 + $0x60] sm:$0xff] %vm1187, %v1104
    %1202 = vst.msk [vmem:[%s2 + $0x68] sm:$0xf] %vm1189, %v1109
    %1203 = vst.msk [vmem:[%s2 + $0x70] sm:$0xff] %vm1187, %v1179
    %1204 = vst.msk [vmem:[%s2 + $0x78] sm:$0xf] %vm1189, %v1184
    // Predicated region
    $region18: #{tpu_custom_call.1} parent=1 // pred_check
      _
    $region19: #{tpu_custom_call.1} parent=1 // pred_check_branch
      %1206 = sbr.rel (0) target = $region21
    $region20: #{tpu_custom_call.1} parent=1 // pred_region
      _
    $region21: #{tpu_custom_call.1} parent=1 // pred_fallthru
      _
    // Predicated region
    $region22: #{tpu_custom_call.1} parent=1 // pred_check
      _
    $region23: #{tpu_custom_call.1} parent=1 // pred_check_branch
      %1208 = sbr.rel (0) target = $region25
    $region24: #{tpu_custom_call.1} parent=1 // pred_region
      _
    $region25: #{tpu_custom_call.1} parent=1 // pred_fallthru
      _
    %1209 = vsyncpa [#allocation3], 1
    %1210 = vsyncpa [#allocation5], 1

</llo_original>
